<compile_context>
chip_gen: v7x
topology: tpu7x:2x2x1
jax: 0.10.0
libtpu: 0.0.40
codegen_flags: <defaults>
</compile_context>

<pallas_src>
import jax
import jax.numpy as jnp
from jax.experimental import pallas as pl
from jax.experimental.pallas import tpu as pltpu

_MIN_TM = 16  # bf16 packs two rows per sublane -> 16-row floor keeps vregs full


def _round_up(x: int, m: int) -> int:
    return ((x + m - 1) // m) * m


def actor_kernel(x_ref, w1_ref, b1_ref, w2_ref, b2_ref, w3_ref, b3_ref, o_ref):
    """One batch tile: three fused MXU matmuls (bf16 in, f32 accumulate), f32 elementwise."""
    # Input cast done in-kernel: VPU has slack in this DMA/MXU-bound kernel.
    x = x_ref[...].astype(w1_ref.dtype)
    # Layer 1: Linear + ReLU
    h1 = jnp.dot(x, w1_ref[...], preferred_element_type=jnp.float32)
    h1 = jnp.maximum(h1 + b1_ref[...], 0.0)
    # Layer 2: Linear + ReLU
    h2 = jnp.dot(h1.astype(w2_ref.dtype), w2_ref[...],
                 preferred_element_type=jnp.float32)
    h2 = jnp.maximum(h2 + b2_ref[...], 0.0)
    # Layer 3: Linear + Tanh (lane-dense 128-wide padded slab)
    h3 = jnp.dot(h2.astype(w3_ref.dtype), w3_ref[...],
                 preferred_element_type=jnp.float32)
    o_ref[...] = jnp.tanh(h3 + b3_ref[...]).astype(o_ref.dtype)


def prepare_params(params, *, compute_dtype=jnp.bfloat16):
    """One-time weight prep: cast MXU operands to bf16, pad final layer to 128 lanes.

    Call ONCE per parameter set and reuse the result; this keeps per-call HBM traffic
    and op-launch overhead off the forward hot path.
    """
    w1, b1, w2, b2, w3, b3 = (params[k] for k in ("w1", "b1", "w2", "b2", "w3", "b3"))
    action_dim = w3.shape[1]
    n3 = _round_up(action_dim, 128)
    w3p = jnp.pad(w3, ((0, 0), (0, n3 - action_dim)))
    b3p = jnp.pad(b3, ((0, 0), (0, n3 - action_dim)))
    return {
        "w1": jnp.asarray(w1, compute_dtype), "b1": jnp.asarray(b1, jnp.float32),
        "w2": jnp.asarray(w2, compute_dtype), "b2": jnp.asarray(b2, jnp.float32),
        "w3": jnp.asarray(w3p, compute_dtype), "b3": jnp.asarray(b3p, jnp.float32),
        "action_dim": action_dim,
    }


def _pick_tile(B: int, batch_tile: int) -> int:
    if B <= _MIN_TM:
        return B                      # full-dim block: always a legal block shape
    if B <= batch_tile:
        # Split into (at least) 2 steps so v7x megacore can use both TensorCores.
        return min(_round_up(-(-B // 2), _MIN_TM), B)
    return batch_tile


def simple_actor_forward(state, prepared, *, batch_tile=1024,
                         out_dtype=jnp.bfloat16, slice_output=True):
    """state: (B, state_dim) float32. prepared: output of prepare_params().

    batch_tile: rows per grid step. Weights are VMEM-resident (constant index_map),
    so per-step working set is just the (tm, state_dim) input and (tm, 128) output
    tiles -> big tiles are cheap even under v7x's 64 MiB VMEM.
    slice_output: if downstream code can consume the 128-wide padded slab directly,
    pass False to skip the trailing column-slice copy.
    """
    w1, b1 = prepared["w1"], prepared["b1"]
    w2, b2 = prepared["w2"], prepared["b2"]
    w3, b3 = prepared["w3"], prepared["b3"]
    action_dim = prepared["action_dim"]

    B, state_dim = state.shape
    hidden = w1.shape[1]
    n3 = w3.shape[1]

    tm = _pick_tile(B, batch_tile)
    grid_m = pl.cdiv(B, tm)           # ragged last block handled by Pallas edge masking

    row_tiled = lambda shape: pl.BlockSpec(shape, lambda i: (i, 0))
    resident = lambda shape: pl.BlockSpec(shape, lambda i: (0, 0))   # pinned in VMEM

    flops = 2 * B * (state_dim * hidden + hidden * hidden + hidden * n3)
    bytes_accessed = (
        B * state_dim * state.dtype.itemsize
        + sum(int(a.size) * a.dtype.itemsize for a in (w1, b1, w2, b2, w3, b3))
        + B * n3 * jnp.dtype(out_dtype).itemsize
    )
    cost = pl.CostEstimate(flops=flops, transcendentals=B * n3,
                           bytes_accessed=bytes_accessed)

    out = pl.pallas_call(
        actor_kernel,
        out_shape=jax.ShapeDtypeStruct((B, n3), out_dtype),
        grid=(grid_m,),
        in_specs=[
            row_tiled((tm, state_dim)),
            resident(w1.shape), resident(b1.shape),
            resident(w2.shape), resident(b2.shape),
            resident(w3.shape), resident(b3.shape),
        ],
        out_specs=row_tiled((tm, n3)),
        compiler_params=pltpu.CompilerParams(
            dimension_semantics=("parallel",),   # megacore-shard the batch on v7x
        ),
        cost_estimate=cost,
    )(state, w1, b1, w2, b2, w3, b3)

    if slice_output:
        return out[:, :action_dim]
    return out


def init_params(key, state_dim, action_dim, hidden_dim=256):
    """Deterministic PyTorch-style Linear init: U(-1/sqrt(fan_in), 1/sqrt(fan_in))."""
    ks = jax.random.split(key, 6)

    def lin(kw, kb, fan_in, fan_out):
        bound = 1.0 / jnp.sqrt(jnp.float32(fan_in))
        w = jax.random.uniform(kw, (fan_in, fan_out), jnp.float32, -bound, bound)
        b = jax.random.uniform(kb, (1, fan_out), jnp.float32, -bound, bound)
        return w, b

    w1, b1 = lin(ks[0], ks[1], state_dim, hidden_dim)
    w2, b2 = lin(ks[2], ks[3], hidden_dim, hidden_dim)
    w3, b3 = lin(ks[4], ks[5], hidden_dim, action_dim)
    return {"w1": w1, "b1": b1, "w2": w2, "b2": b2, "w3": w3, "b3": b3}


def reference_forward(state, params, compute_dtype=jnp.bfloat16):
    """Pure-JAX reference mirroring the kernel's bf16-operand / f32-accumulate math."""
    cd = compute_dtype
    h = jnp.dot(state.astype(cd), params["w1"].astype(cd),
                preferred_element_type=jnp.float32)
    h = jnp.maximum(h + params["b1"], 0.0)
    h = jnp.dot(h.astype(cd), params["w2"].astype(cd),
                preferred_element_type=jnp.float32)
    h = jnp.maximum(h + params["b2"], 0.0)
    h = jnp.dot(h.astype(cd), params["w3"].astype(cd),
                preferred_element_type=jnp.float32)
    return jnp.tanh(h + params["b3"])


def reference_forward_f32(state, params):
    """Full-f32 reference (PyTorch semantics)."""
    h = jnp.maximum(state @ params["w1"] + params["b1"], 0.0)
    h = jnp.maximum(h @ params["w2"] + params["b2"], 0.0)
    return jnp.tanh(h @ params["w3"] + params["b3"])


if __name__ == "__main__":
    key = jax.random.PRNGKey(0)
    k_x, k_x2, k_p = jax.random.split(key, 3)

    batch, state_dim, action_dim, hidden_dim = 8, 32, 8, 256
    params = init_params(k_p, state_dim, action_dim, hidden_dim)
    prepared = prepare_params(params)          # one-time weight prep (hoisted)

    # Small batch: single full-batch block.
    state = jax.random.normal(k_x, (batch, state_dim), jnp.float32)
    out = jax.block_until_ready(simple_actor_forward(state, prepared))
    assert out.shape == (batch, action_dim)
    ref = reference_forward(state, params)
    assert jnp.allclose(out.astype(jnp.float32), ref, atol=8e-3, rtol=8e-3), \
        "mismatch vs bf16 reference"
    ref32 = reference_forward_f32(state, params)
    assert jnp.allclose(out.astype(jnp.float32), ref32, atol=3e-2, rtol=3e-2), \
        "mismatch vs f32 reference"

    # f32-output path (closest to PyTorch semantics) on the same inputs.
    out_f32 = jax.block_until_ready(
        simple_actor_forward(state, prepared, out_dtype=jnp.float32))
    assert jnp.allclose(out_f32, ref, atol=2e-5, rtol=2e-5), \
        "mismatch vs bf16 reference (f32 output)"

    # Larger, non-multiple-of-tile batch: exercises the cdiv grid + ragged last block
    # (no explicit batch padding) on both the default and a forced-small tile.
    batch2 = 300
    state2 = jax.random.normal(k_x2, (batch2, state_dim), jnp.float32)
    ref2 = reference_forward(state2, params)
    out2 = jax.block_until_ready(simple_actor_forward(state2, prepared))
    assert out2.shape == (batch2, action_dim)
    assert jnp.allclose(out2.astype(jnp.float32), ref2, atol=8e-3, rtol=8e-3), \
        "mismatch vs bf16 reference (B=300, default tile)"
    out3 = jax.block_until_ready(
        simple_actor_forward(state2, prepared, batch_tile=128))
    assert jnp.allclose(out3.astype(jnp.float32), ref2, atol=8e-3, rtol=8e-3), \
        "mismatch vs bf16 reference (B=300, tm=128, ragged last block)"

    print("KERNEL_OK")
</pallas_src>

<mosaic_0001>
module attributes {stable_mosaic.version = 11 : i64} {
  func.func @actor_kernel(%arg0: i32, %arg1: memref<8x32xf32, #tpu.memory_space<vmem>>, %arg2: memref<32x256xbf16, #tpu.memory_space<vmem>>, %arg3: memref<1x256xf32, #tpu.memory_space<vmem>>, %arg4: memref<256x256xbf16, #tpu.memory_space<vmem>>, %arg5: memref<1x256xf32, #tpu.memory_space<vmem>>, %arg6: memref<256x128xbf16, #tpu.memory_space<vmem>>, %arg7: memref<1x128xf32, #tpu.memory_space<vmem>>, %arg8: memref<8x128xbf16, #tpu.memory_space<vmem>>) attributes {dimension_semantics = [#tpu.dimension_semantics<parallel>], iteration_bounds = array<i64: 1>, scalar_prefetch = 0 : i64, scratch_operands = 0 : i64, tpu.core_type = #tpu.core_type<tc>, window_params = [{transform_indices = @transform_0, window_bounds = array<i64: 8, 32>}, {pipeline_mode = #tpu.pipeline_mode<synchronous>, transform_indices = @transform_1, window_bounds = array<i64: 32, 256>}, {pipeline_mode = #tpu.pipeline_mode<synchronous>, transform_indices = @transform_2, window_bounds = array<i64: 1, 256>}, {pipeline_mode = #tpu.pipeline_mode<synchronous>, transform_indices = @transform_3, window_bounds = array<i64: 256, 256>}, {pipeline_mode = #tpu.pipeline_mode<synchronous>, transform_indices = @transform_4, window_bounds = array<i64: 1, 256>}, {pipeline_mode = #tpu.pipeline_mode<synchronous>, transform_indices = @transform_5, window_bounds = array<i64: 256, 128>}, {pipeline_mode = #tpu.pipeline_mode<synchronous>, transform_indices = @transform_6, window_bounds = array<i64: 1, 128>}, {transform_indices = @transform_7, window_bounds = array<i64: 8, 128>}]} {
    %c0 = arith.constant 0 : index
    %c0_0 = arith.constant 0 : index
    %0 = vector.load %arg1[%c0, %c0_0] : memref<8x32xf32, #tpu.memory_space<vmem>>, vector<8x32xf32>
    %1 = arith.truncf %0 : vector<8x32xf32> to vector<8x32xbf16>
    %c0_1 = arith.constant 0 : index
    %c0_2 = arith.constant 0 : index
    %2 = vector.load %arg2[%c0_1, %c0_2] : memref<32x256xbf16, #tpu.memory_space<vmem>>, vector<32x256xbf16>
    %cst = arith.constant dense<0.000000e+00> : vector<8x256xf32>
    %3 = tpu.matmul %1, %2, %cst {dimension_numbers = #tpu.dot_dimension_numbers<[1], [0], [0], [1], [0, 0, 1, 1], [], []>} : vector<8x32xbf16>, vector<32x256xbf16>, vector<8x256xf32> -> vector<8x256xf32>
    %c0_3 = arith.constant 0 : index
    %c0_4 = arith.constant 0 : index
    %4 = vector.load %arg3[%c0_3, %c0_4] : memref<1x256xf32, #tpu.memory_space<vmem>>, vector<1x256xf32>
    %5 = vector.broadcast %4 : vector<1x256xf32> to vector<8x256xf32>
    %6 = arith.addf %3, %5 : vector<8x256xf32>
    %cst_5 = arith.constant 0.000000e+00 : f32
    %7 = vector.broadcast %cst_5 : f32 to vector<8x256xf32>
    %8 = arith.maximumf %6, %7 : vector<8x256xf32>
    %9 = arith.truncf %8 : vector<8x256xf32> to vector<8x256xbf16>
    %c0_6 = arith.constant 0 : index
    %c0_7 = arith.constant 0 : index
    %10 = vector.load %arg4[%c0_6, %c0_7] : memref<256x256xbf16, #tpu.memory_space<vmem>>, vector<256x256xbf16>
    %cst_8 = arith.constant dense<0.000000e+00> : vector<8x256xf32>
    %11 = tpu.matmul %9, %10, %cst_8 {dimension_numbers = #tpu.dot_dimension_numbers<[1], [0], [0], [1], [0, 0, 1, 1], [], []>} : vector<8x256xbf16>, vector<256x256xbf16>, vector<8x256xf32> -> vector<8x256xf32>
    %c0_9 = arith.constant 0 : index
    %c0_10 = arith.constant 0 : index
    %12 = vector.load %arg5[%c0_9, %c0_10] : memref<1x256xf32, #tpu.memory_space<vmem>>, vector<1x256xf32>
    %13 = vector.broadcast %12 : vector<1x256xf32> to vector<8x256xf32>
    %14 = arith.addf %11, %13 : vector<8x256xf32>
    %cst_11 = arith.constant 0.000000e+00 : f32
    %15 = vector.broadcast %cst_11 : f32 to vector<8x256xf32>
    %16 = arith.maximumf %14, %15 : vector<8x256xf32>
    %17 = arith.truncf %16 : vector<8x256xf32> to vector<8x256xbf16>
    %c0_12 = arith.constant 0 : index
    %c0_13 = arith.constant 0 : index
    %18 = vector.load %arg6[%c0_12, %c0_13] : memref<256x128xbf16, #tpu.memory_space<vmem>>, vector<256x128xbf16>
    %cst_14 = arith.constant dense<0.000000e+00> : vector<8x128xf32>
    %19 = tpu.matmul %17, %18, %cst_14 {dimension_numbers = #tpu.dot_dimension_numbers<[1], [0], [0], [1], [0, 0, 1, 1], [], []>} : vector<8x256xbf16>, vector<256x128xbf16>, vector<8x128xf32> -> vector<8x128xf32>
    %c0_15 = arith.constant 0 : index
    %c0_16 = arith.constant 0 : index
    %20 = vector.load %arg7[%c0_15, %c0_16] : memref<1x128xf32, #tpu.memory_space<vmem>>, vector<1x128xf32>
    %21 = vector.broadcast %20 : vector<1x128xf32> to vector<8x128xf32>
    %22 = arith.addf %19, %21 : vector<8x128xf32>
    %23 = math.tanh %22 : vector<8x128xf32>
    %24 = arith.truncf %23 : vector<8x128xf32> to vector<8x128xbf16>
    %c0_17 = arith.constant 0 : index
    %c0_18 = arith.constant 0 : index
    %25 = vector.load %arg8[%c0_17, %c0_18] : memref<8x128xbf16, #tpu.memory_space<vmem>>, vector<8x128xbf16>
    tpu.vector_store %arg8[%c0_17, %c0_18], %24 {strides = array<i32>} : memref<8x128xbf16, #tpu.memory_space<vmem>>, vector<8x128xbf16>,
    return
  }
  func.func @transform_0(%arg0: i32) -> (i32, i32) {
    %c0_i32 = arith.constant 0 : i32
    %c0_i32_0 = arith.constant 0 : i32
    return %arg0, %c0_i32 : i32, i32
  }
  func.func @transform_1(%arg0: i32) -> (i32, i32) {
    %c0_i32 = arith.constant 0 : i32
    %c0_i32_0 = arith.constant 0 : i32
    %c0_i32_1 = arith.constant 0 : i32
    return %c0_i32, %c0_i32_0 : i32, i32
  }
  func.func @transform_2(%arg0: i32) -> (i32, i32) {
    %c0_i32 = arith.constant 0 : i32
    %c0_i32_0 = arith.constant 0 : i32
    %c0_i32_1 = arith.constant 0 : i32
    return %c0_i32, %c0_i32_0 : i32, i32
  }
  func.func @transform_3(%arg0: i32) -> (i32, i32) {
    %c0_i32 = arith.constant 0 : i32
    %c0_i32_0 = arith.constant 0 : i32
    %c0_i32_1 = arith.constant 0 : i32
    return %c0_i32, %c0_i32_0 : i32, i32
  }
  func.func @transform_4(%arg0: i32) -> (i32, i32) {
    %c0_i32 = arith.constant 0 : i32
    %c0_i32_0 = arith.constant 0 : i32
    %c0_i32_1 = arith.constant 0 : i32
    return %c0_i32, %c0_i32_0 : i32, i32
  }
  func.func @transform_5(%arg0: i32) -> (i32, i32) {
    %c0_i32 = arith.constant 0 : i32
    %c0_i32_0 = arith.constant 0 : i32
    %c0_i32_1 = arith.constant 0 : i32
    return %c0_i32, %c0_i32_0 : i32, i32
  }
  func.func @transform_6(%arg0: i32) -> (i32, i32) {
    %c0_i32 = arith.constant 0 : i32
    %c0_i32_0 = arith.constant 0 : i32
    %c0_i32_1 = arith.constant 0 : i32
    return %c0_i32, %c0_i32_0 : i32, i32
  }
  func.func @transform_7(%arg0: i32) -> (i32, i32) {
    %c0_i32 = arith.constant 0 : i32
    %c0_i32_0 = arith.constant 0 : i32
    return %arg0, %c0_i32 : i32, i32
  }
}

</mosaic_0001>

<llo_original>
// kernel: tpu_custom_call.1
$region0: #{tpu_custom_call.1}
  #allocation0 [shape = 'u32[]', space=smem, size = 0x4, offset = 0x4, fixed_abs, tag = 'smem constant byte address 0x4 - core index']
  #allocation1 [shape = 'u32[144,128]{1,0:T(1,128)}', space=vmem, size = 0x12000, scoped, tag = 'internal scratch']
  %s0 = inlined_call_operand.hbm [shape: f32[8,32], index: 0, kind: input, shape index: {}]
  %s1 = inlined_call_operand.hbm [shape: bf16[32,256], index: 1, kind: input, shape index: {}]
  %s2 = inlined_call_operand.vmem [shape: f32[1,256], index: 2, kind: input, shape index: {}]
  %s3 = inlined_call_operand.hbm [shape: bf16[256,256], index: 3, kind: input, shape index: {}]
  %s4 = inlined_call_operand.vmem [shape: f32[1,256], index: 4, kind: input, shape index: {}]
  %s5 = inlined_call_operand.hbm [shape: bf16[256,128], index: 5, kind: input, shape index: {}]
  %s6 = inlined_call_operand.vmem [shape: f32[1,128], index: 6, kind: input, shape index: {}]
  %s7 = inlined_call_operand.hbm [shape: bf16[8,128], index: 7, kind: output, shape index: {}]
  %s8 = sld [smem:[#allocation0]]
  $region54: #{tpu_custom_call.1} parent=0
    _
  %s10 = ssub.s32 1, %s8
  %s11 = scalar_select 0, %s10, %s8
  $region1: #{tpu_custom_call.1} parent=0
    #allocation2 [shape = 'u8[4096]{0}', space=vmem, size = 0x1000, scoped, tag = 'input window, operand 0, single buffered']
    #allocation3 [shape = 's32[1]{0}', space=sflag, size = 0x4, scoped, tag = 'scoped memory for tpu_custom_call.1']
    #allocation4 [shape = 's32[1]{0}', space=sflag, size = 0x4, scoped, tag = 'scoped memory for tpu_custom_call.1']
    #allocation5 [shape = 'u8[16384]{0}', space=vmem, size = 0x4000, scoped, tag = 'input window, operand 1, single buffered']
    #allocation6 [shape = 's32[1]{0}', space=sflag, size = 0x4, scoped, tag = 'scoped memory for tpu_custom_call.1']
    #allocation7 [shape = 'u8[131072]{0}', space=vmem, size = 0x20000, scoped, tag = 'input window, operand 3, single buffered']
    #allocation8 [shape = 'u8[65536]{0}', space=vmem, size = 0x10000, scoped, tag = 'input window, operand 5, single buffered']
    #allocation9 [shape = 's32[1]{0}', space=sflag, size = 0x4, scoped, tag = 'scoped memory for tpu_custom_call.1']
    #allocation10 [shape = 'u8[2048]{0}', space=vmem, size = 0x800, scoped, tag = 'output window, operand 0, single buffered']
    %12 = vsyncpa [#allocation3], 0
    %13 = vsyncpa [#allocation6], 0
    %14 = vsyncpa [#allocation9], 0
    %15 = vsyncpa [#allocation4], 0
    // Predicated region
    $region2: #{tpu_custom_call.1} parent=1 // pred_check
      _
    $region3: #{tpu_custom_call.1} parent=1 // pred_check_branch
      %17 = sbr.rel (0) target = $region5
    $region4: #{tpu_custom_call.1} parent=1 // pred_region
      %s19 = ssub.s32 128, 128
      %20 = vsyncadd [#allocation3], %s19
      %s22 = sshll.u32 [#allocation2], 4
      %s23 = int_to_ptr.vmem [resolvable:$true] %s22
      %25 = dma.hbm_to_vmem [thread:$0]  %s0, 128, %s23, [#allocation3]
    $region5: #{tpu_custom_call.1} parent=1 // pred_fallthru
      _
    // Predicated region
    $region6: #{tpu_custom_call.1} parent=1 // pred_check
      _
    $region7: #{tpu_custom_call.1} parent=1 // pred_check_branch
      %27 = sbr.rel (0) target = $region9
    $region8: #{tpu_custom_call.1} parent=1 // pred_region
      %s29 = ssub.s32 512, 512
      %30 = vsyncadd [#allocation6], %s29
      %s31 = sshll.u32 [#allocation5], 4
      %s32 = int_to_ptr.vmem [resolvable:$true] %s31
      %37 = dma.hbm_to_vmem [thread:$0]  %s1, 512, %s32, [#allocation6], 128, 128, 8
    $region9: #{tpu_custom_call.1} parent=1 // pred_fallthru
      _
    // Predicated region
    $region10: #{tpu_custom_call.1} parent=1 // pred_check
      _
    $region11: #{tpu_custom_call.1} parent=1 // pred_check_branch
      %39 = sbr.rel (0) target = $region13
    $region12: #{tpu_custom_call.1} parent=1 // pred_region
      _
    $region13: #{tpu_custom_call.1} parent=1 // pred_fallthru
      _
    // Predicated region
    $region14: #{tpu_custom_call.1} parent=1 // pred_check
      _
    $region15: #{tpu_custom_call.1} parent=1 // pred_check_branch
      %41 = sbr.rel (0) target = $region17
    $region16: #{tpu_custom_call.1} parent=1 // pred_region
      %s43 = ssub.s32 4096, 4096
      %44 = vsyncadd [#allocation6], %s43
      %s45 = sshll.u32 [#allocation7], 4
      %s46 = int_to_ptr.vmem [resolvable:$true] %s45
      %51 = dma.hbm_to_vmem [thread:$0]  %s3, 4096, %s46, [#allocation6], 128, 128, 8
    $region17: #{tpu_custom_call.1} parent=1 // pred_fallthru
      _
    // Predicated region
    $region18: #{tpu_custom_call.1} parent=1 // pred_check
      _
    $region19: #{tpu_custom_call.1} parent=1 // pred_check_branch
      %53 = sbr.rel (0) target = $region21
    $region20: #{tpu_custom_call.1} parent=1 // pred_region
      _
    $region21: #{tpu_custom_call.1} parent=1 // pred_fallthru
      _
    // Predicated region
    $region22: #{tpu_custom_call.1} parent=1 // pred_check
      _
    $region23: #{tpu_custom_call.1} parent=1 // pred_check_branch
      %55 = sbr.rel (0) target = $region25
    $region24: #{tpu_custom_call.1} parent=1 // pred_region
      %s57 = ssub.s32 2048, 2048
      %58 = vsyncadd [#allocation9], %s57
      %s59 = sshll.u32 [#allocation8], 4
      %s60 = int_to_ptr.vmem [resolvable:$true] %s59
      %65 = dma.hbm_to_vmem [thread:$0]  %s5, 2048, %s60, [#allocation9], 64, 64, 4
    $region25: #{tpu_custom_call.1} parent=1 // pred_fallthru
      _
    // Predicated region
    $region26: #{tpu_custom_call.1} parent=1 // pred_check
      _
    $region27: #{tpu_custom_call.1} parent=1 // pred_check_branch
      %67 = sbr.rel (0) target = $region29
    $region28: #{tpu_custom_call.1} parent=1 // pred_region
      _
    $region29: #{tpu_custom_call.1} parent=1 // pred_fallthru
      _
    // Predicated region
    $region30: #{tpu_custom_call.1} parent=1 // pred_check
      _
    $region31: #{tpu_custom_call.1} parent=1 // pred_check_branch
      %69 = sbr.rel (0) target = $region33
    $region32: #{tpu_custom_call.1} parent=1 // pred_region
      %70 = dma.done [#allocation3], 128
    $region33: #{tpu_custom_call.1} parent=1 // pred_fallthru
      _
    // Predicated region
    $region34: #{tpu_custom_call.1} parent=1 // pred_check
      _
    $region35: #{tpu_custom_call.1} parent=1 // pred_check_branch
      %72 = sbr.rel (0) target = $region37
    $region36: #{tpu_custom_call.1} parent=1 // pred_region
      %73 = dma.done [#allocation6], 512
    $region37: #{tpu_custom_call.1} parent=1 // pred_fallthru
      _
    // Predicated region
    $region38: #{tpu_custom_call.1} parent=1 // pred_check
      _
    $region39: #{tpu_custom_call.1} parent=1 // pred_check_branch
      %75 = sbr.rel (0) target = $region41
    $region40: #{tpu_custom_call.1} parent=1 // pred_region
      %76 = dma.done [#allocation6], 4096
    $region41: #{tpu_custom_call.1} parent=1 // pred_fallthru
      _
    // Predicated region
    $region42: #{tpu_custom_call.1} parent=1 // pred_check
      _
    $region43: #{tpu_custom_call.1} parent=1 // pred_check_branch
      %78 = sbr.rel (0) target = $region45
    $region44: #{tpu_custom_call.1} parent=1 // pred_region
      %79 = dma.done [#allocation9], 2048
    $region45: #{tpu_custom_call.1} parent=1 // pred_fallthru
      _
    %v81 = vld [vmem:[#allocation2] sm:$0xff]
    %v82 = vpack.c.bf16 %v81, %v81
    %v83 = vld [vmem:[#allocation5] sm:$0xff]
    %v84 = vld [vmem:[#allocation5 + $0x8] sm:$0xff]
    %v85 = vld [vmem:[#allocation5 + $0x10] sm:$0xff]
    %v86 = vld [vmem:[#allocation5 + $0x18] sm:$0xff]
    %v87 = vld [vmem:[%s2] sm:$0x3]
    %v89 = vlaneseq
    %v90 = vshrl.u32 %v89, 7
    %v91 = vsub.s32 0, %v90
    %v92 = vrot.slane %v87, %v91
    %v93 = vlaneseq
    %v94 = vshrl.u32 %v93, 7
    %v95 = vsub.s32 1, %v94
    %v96 = vrot.slane %v87, %v95
    %v103 = vunpack.c.l.b16 %v83
    %v104 = vunpack.c.h.b16 %v83
    %v105 = vunpack.c.l.b16 %v84
    %v106 = vunpack.c.h.b16 %v84
    %v107 = vunpack.c.l.b16 %v85
    %v108 = vunpack.c.h.b16 %v85
    %v109 = vunpack.c.l.b16 %v86
    %v110 = vunpack.c.h.b16 %v86
    %v111 = vpack.c.b16 %v105, %v103
    %v112 = vpack.c.b16 %v106, %v104
    %v113 = vpack.c.b16 %v109, %v107
    %v114 = vpack.c.b16 %v110, %v108
    %vm119 = vcmask 261120
    %v121 = vsel %vm119, %v82, 0
    %123 = vmatprep.subr.bf16.mxu0 %v112
    %124 = vmatpush1.bf16.msra.mxu0 %v111
    %125 = vmatprep.subr.bf16.mxu0 %v114
    %126 = vmatpush1.bf16.msra.mxu0 %v113
    %127 = vmatprep.subr.bf16.mxu0 0
    %128 = vmatpush1.bf16.msra.mxu0 0
    %129 = vmatprep.subr.bf16.mxu0 0
    %130 = vmatpush1.bf16.msra.mxu0 0
    %131 = vmatprep.subr.bf16.mxu0 0
    %132 = vmatpush1.bf16.msra.mxu0 0
    %133 = vmatprep.subr.bf16.mxu0 0
    %134 = vmatpush1.bf16.msra.mxu0 0
    %135 = vmatprep.subr.bf16.mxu0 0
    %136 = vmatpush1.bf16.msra.mxu0 0
    %137 = vmatprep.subr.bf16.mxu0 0
    %138 = vmatpush1.bf16.msra.mxu0 0
    %139 = vmatprep.subr.bf16.mxu0 0
    %140 = vmatpush1.bf16.msra.mxu0 0
    %141 = vmatprep.subr.bf16.mxu0 0
    %142 = vmatpush1.bf16.msra.mxu0 0
    %143 = vmatprep.subr.bf16.mxu0 0
    %144 = vmatpush1.bf16.msra.mxu0 0
    %145 = vmatprep.subr.bf16.mxu0 0
    %146 = vmatpush1.bf16.msra.mxu0 0
    %147 = vmatprep.subr.bf16.mxu0 0
    %148 = vmatpush1.bf16.msra.mxu0 0
    %149 = vmatprep.subr.bf16.mxu0 0
    %150 = vmatpush1.bf16.msra.mxu0 0
    %151 = vmatprep.subr.bf16.mxu0 0
    %152 = vmatpush1.bf16.msra.mxu0 0
    %153 = vmatprep.subr.bf16.mxu0 0
    %154 = vmatpush1.bf16.msra.mxu0 0
    %155 = vmatprep.mubr.bf16.mxu0 0
    %156 = vmatmul.mubr.bf16.gmra.mrb[0].mxu0 %v121
    %v157 = vpop.f32.mrb[0].mxu0
    %v158 = vadd.f32 %v92, %v157
    %v159 = vpop.f32.mrb[0].mxu0
    %v160 = vadd.f32 %v96, %v159
    %v161 = vpop.f32.mrb[0].mxu0
    %v162 = vpop.f32.mrb[0].mxu0
    %163 = vdwg.mxu0
    %v164 = vmax.f32 %v158, 0.0
    %v165 = vmax.f32 %v160, 0.0
    %v166 = vpack.c.bf16 %v164, %v164
    %v167 = vpack.c.bf16 %v165, %v165
    %v168 = vld [vmem:[#allocation7] sm:$0xff]
    %v169 = vld [vmem:[#allocation7 + $0x8] sm:$0xff]
    %v170 = vld [vmem:[#allocation7 + $0x10] sm:$0xff]
    %v171 = vld [vmem:[#allocation7 + $0x18] sm:$0xff]
    %v172 = vld [vmem:[#allocation7 + $0x20] sm:$0xff]
    %v173 = vld [vmem:[#allocation7 + $0x28] sm:$0xff]
    %v174 = vld [vmem:[#allocation7 + $0x30] sm:$0xff]
    %v175 = vld [vmem:[#allocation7 + $0x38] sm:$0xff]
    %v176 = vld [vmem:[#allocation7 + $0x40] sm:$0xff]
    %v177 = vld [vmem:[#allocation7 + $0x48] sm:$0xff]
    %v178 = vld [vmem:[#allocation7 + $0x50] sm:$0xff]
    %v179 = vld [vmem:[#allocation7 + $0x58] sm:$0xff]
    %v180 = vld [vmem:[#allocation7 + $0x60] sm:$0xff]
    %v181 = vld [vmem:[#allocation7 + $0x68] sm:$0xff]
    %v182 = vld [vmem:[#allocation7 + $0x70] sm:$0xff]
    %v183 = vld [vmem:[#allocation7 + $0x78] sm:$0xff]
    %v184 = vld [vmem:[#allocation7 + $0x80] sm:$0xff]
    %v185 = vld [vmem:[#allocation7 + $0x88] sm:$0xff]
    %v186 = vld [vmem:[#allocation7 + $0x90] sm:$0xff]
    %v187 = vld [vmem:[#allocation7 + $0x98] sm:$0xff]
    %v188 = vld [vmem:[#allocation7 + $0xa0] sm:$0xff]
    %v189 = vld [vmem:[#allocation7 + $0xa8] sm:$0xff]
    %v190 = vld [vmem:[#allocation7 + $0xb0] sm:$0xff]
    %v191 = vld [vmem:[#allocation7 + $0xb8] sm:$0xff]
    %v192 = vld [vmem:[#allocation7 + $0xc0] sm:$0xff]
    %v193 = vld [vmem:[#allocation7 + $0xc8] sm:$0xff]
    %v194 = vld [vmem:[#allocation7 + $0xd0] sm:$0xff]
    %v195 = vld [vmem:[#allocation7 + $0xd8] sm:$0xff]
    %v196 = vld [vmem:[#allocation7 + $0xe0] sm:$0xff]
    %v197 = vld [vmem:[#allocation7 + $0xe8] sm:$0xff]
    %v198 = vld [vmem:[#allocation7 + $0xf0] sm:$0xff]
    %v199 = vld [vmem:[#allocation7 + $0xf8] sm:$0xff]
    %v200 = vld [vmem:[%s4] sm:$0x3]
    %v202 = vlaneseq
    %v203 = vshrl.u32 %v202, 7
    %v204 = vsub.s32 0, %v203
    %v205 = vrot.slane %v200, %v204
    %v206 = vlaneseq
    %v207 = vshrl.u32 %v206, 7
    %v208 = vsub.s32 1, %v207
    %v209 = vrot.slane %v200, %v208
    %v244 = vunpack.c.l.b16 %v168
    %v245 = vunpack.c.h.b16 %v168
    %v246 = vunpack.c.l.b16 %v169
    %v247 = vunpack.c.h.b16 %v169
    %v248 = vunpack.c.l.b16 %v170
    %v249 = vunpack.c.h.b16 %v170
    %v250 = vunpack.c.l.b16 %v171
    %v251 = vunpack.c.h.b16 %v171
    %v252 = vunpack.c.l.b16 %v172
    %v253 = vunpack.c.h.b16 %v172
    %v254 = vunpack.c.l.b16 %v173
    %v255 = vunpack.c.h.b16 %v173
    %v256 = vunpack.c.l.b16 %v174
    %v257 = vunpack.c.h.b16 %v174
    %v258 = vunpack.c.l.b16 %v175
    %v259 = vunpack.c.h.b16 %v175
    %v260 = vunpack.c.l.b16 %v176
    %v261 = vunpack.c.h.b16 %v176
    %v262 = vunpack.c.l.b16 %v177
    %v263 = vunpack.c.h.b16 %v177
    %v264 = vunpack.c.l.b16 %v178
    %v265 = vunpack.c.h.b16 %v178
    %v266 = vunpack.c.l.b16 %v179
    %v267 = vunpack.c.h.b16 %v179
    %v268 = vunpack.c.l.b16 %v180
    %v269 = vunpack.c.h.b16 %v180
    %v270 = vunpack.c.l.b16 %v181
    %v271 = vunpack.c.h.b16 %v181
    %v272 = vunpack.c.l.b16 %v182
    %v273 = vunpack.c.h.b16 %v182
    %v274 = vunpack.c.l.b16 %v183
    %v275 = vunpack.c.h.b16 %v183
    %v276 = vunpack.c.l.b16 %v184
    %v277 = vunpack.c.h.b16 %v184
    %v278 = vunpack.c.l.b16 %v185
    %v279 = vunpack.c.h.b16 %v185
    %v280 = vunpack.c.l.b16 %v186
    %v281 = vunpack.c.h.b16 %v186
    %v282 = vunpack.c.l.b16 %v187
    %v283 = vunpack.c.h.b16 %v187
    %v284 = vunpack.c.l.b16 %v188
    %v285 = vunpack.c.h.b16 %v188
    %v286 = vunpack.c.l.b16 %v189
    %v287 = vunpack.c.h.b16 %v189
    %v288 = vunpack.c.l.b16 %v190
    %v289 = vunpack.c.h.b16 %v190
    %v290 = vunpack.c.l.b16 %v191
    %v291 = vunpack.c.h.b16 %v191
    %v292 = vunpack.c.l.b16 %v192
    %v293 = vunpack.c.h.b16 %v192
    %v294 = vunpack.c.l.b16 %v193
    %v295 = vunpack.c.h.b16 %v193
    %v296 = vunpack.c.l.b16 %v194
    %v297 = vunpack.c.h.b16 %v194
    %v298 = vunpack.c.l.b16 %v195
    %v299 = vunpack.c.h.b16 %v195
    %v300 = vunpack.c.l.b16 %v196
    %v301 = vunpack.c.h.b16 %v196
    %v302 = vunpack.c.l.b16 %v197
    %v303 = vunpack.c.h.b16 %v197
    %v304 = vunpack.c.l.b16 %v198
    %v305 = vunpack.c.h.b16 %v198
    %v306 = vunpack.c.l.b16 %v199
    %v307 = vunpack.c.h.b16 %v199
    %v308 = vpack.c.b16 %v246, %v244
    %v309 = vpack.c.b16 %v247, %v245
    %v310 = vpack.c.b16 %v250, %v248
    %v311 = vpack.c.b16 %v251, %v249
    %v312 = vpack.c.b16 %v254, %v252
    %v313 = vpack.c.b16 %v255, %v253
    %v314 = vpack.c.b16 %v258, %v256
    %v315 = vpack.c.b16 %v259, %v257
    %v316 = vpack.c.b16 %v262, %v260
    %v317 = vpack.c.b16 %v263, %v261
    %v318 = vpack.c.b16 %v266, %v264
    %v319 = vpack.c.b16 %v267, %v265
    %v320 = vpack.c.b16 %v270, %v268
    %v321 = vpack.c.b16 %v271, %v269
    %v322 = vpack.c.b16 %v274, %v272
    %v323 = vpack.c.b16 %v275, %v273
    %v324 = vpack.c.b16 %v278, %v276
    %v325 = vpack.c.b16 %v279, %v277
    %v326 = vpack.c.b16 %v282, %v280
    %v327 = vpack.c.b16 %v283, %v281
    %v328 = vpack.c.b16 %v286, %v284
    %v329 = vpack.c.b16 %v287, %v285
    %v330 = vpack.c.b16 %v290, %v288
    %v331 = vpack.c.b16 %v291, %v289
    %v332 = vpack.c.b16 %v294, %v292
    %v333 = vpack.c.b16 %v295, %v293
    %v334 = vpack.c.b16 %v298, %v296
    %v335 = vpack.c.b16 %v299, %v297
    %v336 = vpack.c.b16 %v302, %v300
    %v337 = vpack.c.b16 %v303, %v301
    %v338 = vpack.c.b16 %v306, %v304
    %v339 = vpack.c.b16 %v307, %v305
    %372 = vmatprep.subr.bf16.mxu0 %v309
    %373 = vmatpush1.bf16.msra.mxu0 %v308
    %374 = vmatprep.subr.bf16.mxu0 %v311
    %375 = vmatpush1.bf16.msra.mxu0 %v310
    %376 = vmatprep.subr.bf16.mxu0 %v313
    %377 = vmatpush1.bf16.msra.mxu0 %v312
    %378 = vmatprep.subr.bf16.mxu0 %v315
    %379 = vmatpush1.bf16.msra.mxu0 %v314
    %380 = vmatprep.subr.bf16.mxu0 %v317
    %381 = vmatpush1.bf16.msra.mxu0 %v316
    %382 = vmatprep.subr.bf16.mxu0 %v319
    %383 = vmatpush1.bf16.msra.mxu0 %v318
    %384 = vmatprep.subr.bf16.mxu0 %v321
    %385 = vmatpush1.bf16.msra.mxu0 %v320
    %386 = vmatprep.subr.bf16.mxu0 %v323
    %387 = vmatpush1.bf16.msra.mxu0 %v322
    %388 = vmatprep.subr.bf16.mxu0 %v325
    %389 = vmatpush1.bf16.msra.mxu0 %v324
    %390 = vmatprep.subr.bf16.mxu0 %v327
    %391 = vmatpush1.bf16.msra.mxu0 %v326
    %392 = vmatprep.subr.bf16.mxu0 %v329
    %393 = vmatpush1.bf16.msra.mxu0 %v328
    %394 = vmatprep.subr.bf16.mxu0 %v331
    %395 = vmatpush1.bf16.msra.mxu0 %v330
    %396 = vmatprep.subr.bf16.mxu0 %v333
    %397 = vmatpush1.bf16.msra.mxu0 %v332
    %398 = vmatprep.subr.bf16.mxu0 %v335
    %399 = vmatpush1.bf16.msra.mxu0 %v334
    %400 = vmatprep.subr.bf16.mxu0 %v337
    %401 = vmatpush1.bf16.msra.mxu0 %v336
    %402 = vmatprep.subr.bf16.mxu0 %v339
    %403 = vmatpush1.bf16.msra.mxu0 %v338
    %404 = vmatprep.mubr.bf16.mxu0 %v167
    %405 = vmatmul.mubr.bf16.gmra.mrb[0].mxu0 %v166
    %v406 = vpop.f32.mrb[0].mxu0
    %v407 = vadd.f32 %v205, %v406
    %v408 = vpop.f32.mrb[0].mxu0
    %v409 = vadd.f32 %v209, %v408
    %v410 = vpop.f32.mrb[0].mxu0
    %v411 = vpop.f32.mrb[0].mxu0
    %412 = vdwg.mxu0
    %v413 = vmax.f32 %v407, 0.0
    %v414 = vmax.f32 %v409, 0.0
    %v415 = vpack.c.bf16 %v413, %v413
    %v416 = vpack.c.bf16 %v414, %v414
    %v417 = vld [vmem:[#allocation8] sm:$0xf]
    %v418 = vld [vmem:[#allocation8 + $0x4] sm:$0xf]
    %v419 = vld [vmem:[#allocation8 + $0x8] sm:$0xf]
    %v420 = vld [vmem:[#allocation8 + $0xc] sm:$0xf]
    %v421 = vld [vmem:[#allocation8 + $0x10] sm:$0xf]
    %v422 = vld [vmem:[#allocation8 + $0x14] sm:$0xf]
    %v423 = vld [vmem:[#allocation8 + $0x18] sm:$0xf]
    %v424 = vld [vmem:[#allocation8 + $0x1c] sm:$0xf]
    %v425 = vld [vmem:[#allocation8 + $0x20] sm:$0xf]
    %v426 = vld [vmem:[#allocation8 + $0x24] sm:$0xf]
    %v427 = vld [vmem:[#allocation8 + $0x28] sm:$0xf]
    %v428 = vld [vmem:[#allocation8 + $0x2c] sm:$0xf]
    %v429 = vld [vmem:[#allocation8 + $0x30] sm:$0xf]
    %v430 = vld [vmem:[#allocation8 + $0x34] sm:$0xf]
    %v431 = vld [vmem:[#allocation8 + $0x38] sm:$0xf]
    %v432 = vld [vmem:[#allocation8 + $0x3c] sm:$0xf]
    %v433 = vld [vmem:[#allocation8 + $0x40] sm:$0xf]
    %v434 = vld [vmem:[#allocation8 + $0x44] sm:$0xf]
    %v435 = vld [vmem:[#allocation8 + $0x48] sm:$0xf]
    %v436 = vld [vmem:[#allocation8 + $0x4c] sm:$0xf]
    %v437 = vld [vmem:[#allocation8 + $0x50] sm:$0xf]
    %v438 = vld [vmem:[#allocation8 + $0x54] sm:$0xf]
    %v439 = vld [vmem:[#allocation8 + $0x58] sm:$0xf]
    %v440 = vld [vmem:[#allocation8 + $0x5c] sm:$0xf]
    %v441 = vld [vmem:[#allocation8 + $0x60] sm:$0xf]
    %v442 = vld [vmem:[#allocation8 + $0x64] sm:$0xf]
    %v443 = vld [vmem:[#allocation8 + $0x68] sm:$0xf]
    %v444 = vld [vmem:[#allocation8 + $0x6c] sm:$0xf]
    %v445 = vld [vmem:[#allocation8 + $0x70] sm:$0xf]
    %v446 = vld [vmem:[#allocation8 + $0x74] sm:$0xf]
    %v447 = vld [vmem:[#allocation8 + $0x78] sm:$0xf]
    %v448 = vld [vmem:[#allocation8 + $0x7c] sm:$0xf]
    %v449 = vld [vmem:[%s6] sm:$0x1]
    %v451 = vlaneseq
    %v452 = vshrl.u32 %v451, 7
    %v453 = vsub.s32 0, %v452
    %v454 = vrot.slane %v449, %v453
    %v488 = vunpack.c.l.b16 %v417
    %v489 = vunpack.c.l.b16 %v418
    %v490 = vunpack.c.l.b16 %v419
    %v491 = vunpack.c.l.b16 %v420
    %v492 = vunpack.c.l.b16 %v421
    %v493 = vunpack.c.l.b16 %v422
    %v494 = vunpack.c.l.b16 %v423
    %v495 = vunpack.c.l.b16 %v424
    %v496 = vunpack.c.l.b16 %v425
    %v497 = vunpack.c.l.b16 %v426
    %v498 = vunpack.c.l.b16 %v427
    %v499 = vunpack.c.l.b16 %v428
    %v500 = vunpack.c.l.b16 %v429
    %v501 = vunpack.c.l.b16 %v430
    %v502 = vunpack.c.l.b16 %v431
    %v503 = vunpack.c.l.b16 %v432
    %v504 = vunpack.c.l.b16 %v433
    %v505 = vunpack.c.l.b16 %v434
    %v506 = vunpack.c.l.b16 %v435
    %v507 = vunpack.c.l.b16 %v436
    %v508 = vunpack.c.l.b16 %v437
    %v509 = vunpack.c.l.b16 %v438
    %v510 = vunpack.c.l.b16 %v439
    %v511 = vunpack.c.l.b16 %v440
    %v512 = vunpack.c.l.b16 %v441
    %v513 = vunpack.c.l.b16 %v442
    %v514 = vunpack.c.l.b16 %v443
    %v515 = vunpack.c.l.b16 %v444
    %v516 = vunpack.c.l.b16 %v445
    %v517 = vunpack.c.l.b16 %v446
    %v518 = vunpack.c.l.b16 %v447
    %v519 = vunpack.c.l.b16 %v448
    %v520 = vpack.c.b16 %v489, %v488
    %v521 = vpack.c.b16 %v491, %v490
    %v522 = vpack.c.b16 %v493, %v492
    %v523 = vpack.c.b16 %v495, %v494
    %v524 = vpack.c.b16 %v497, %v496
    %v525 = vpack.c.b16 %v499, %v498
    %v526 = vpack.c.b16 %v501, %v500
    %v527 = vpack.c.b16 %v503, %v502
    %v528 = vpack.c.b16 %v505, %v504
    %v529 = vpack.c.b16 %v507, %v506
    %v530 = vpack.c.b16 %v509, %v508
    %v531 = vpack.c.b16 %v511, %v510
    %v532 = vpack.c.b16 %v513, %v512
    %v533 = vpack.c.b16 %v515, %v514
    %v534 = vpack.c.b16 %v517, %v516
    %v535 = vpack.c.b16 %v519, %v518
    %552 = vmatprep.subr.bf16.mxu0 0
    %553 = vmatpush1.bf16.msra.mxu0 %v520
    %554 = vmatprep.subr.bf16.mxu0 0
    %555 = vmatpush1.bf16.msra.mxu0 %v521
    %556 = vmatprep.subr.bf16.mxu0 0
    %557 = vmatpush1.bf16.msra.mxu0 %v522
    %558 = vmatprep.subr.bf16.mxu0 0
    %559 = vmatpush1.bf16.msra.mxu0 %v523
    %560 = vmatprep.subr.bf16.mxu0 0
    %561 = vmatpush1.bf16.msra.mxu0 %v524
    %562 = vmatprep.subr.bf16.mxu0 0
    %563 = vmatpush1.bf16.msra.mxu0 %v525
    %564 = vmatprep.subr.bf16.mxu0 0
    %565 = vmatpush1.bf16.msra.mxu0 %v526
    %566 = vmatprep.subr.bf16.mxu0 0
    %567 = vmatpush1.bf16.msra.mxu0 %v527
    %568 = vmatprep.subr.bf16.mxu0 0
    %569 = vmatpush1.bf16.msra.mxu0 %v528
    %570 = vmatprep.subr.bf16.mxu0 0
    %571 = vmatpush1.bf16.msra.mxu0 %v529
    %572 = vmatprep.subr.bf16.mxu0 0
    %573 = vmatpush1.bf16.msra.mxu0 %v530
    %574 = vmatprep.subr.bf16.mxu0 0
    %575 = vmatpush1.bf16.msra.mxu0 %v531
    %576 = vmatprep.subr.bf16.mxu0 0
    %577 = vmatpush1.bf16.msra.mxu0 %v532
    %578 = vmatprep.subr.bf16.mxu0 0
    %579 = vmatpush1.bf16.msra.mxu0 %v533
    %580 = vmatprep.subr.bf16.mxu0 0
    %581 = vmatpush1.bf16.msra.mxu0 %v534
    %582 = vmatprep.subr.bf16.mxu0 0
    %583 = vmatpush1.bf16.msra.mxu0 %v535
    %584 = vmatprep.mubr.bf16.mxu0 %v416
    %585 = vmatmul.mubr.bf16.gmra.mrb[0].mxu0 %v415
    %v586 = vpop.f32.mrb[0].mxu0
    %v587 = vadd.f32 %v454, %v586
    %v588 = vpop.f32.mrb[0].mxu0
    %v589 = vpop.f32.mrb[0].mxu0
    %v590 = vpop.f32.mrb[0].mxu0
    %591 = vdwg.mxu0
    %v592 = vtanh.pop %v587
    %v593 = vpack.c.bf16 %v592, %v592
    %594 = vst [vmem:[#allocation10] sm:$0xf] %v593
    // Predicated region
    $region46: #{tpu_custom_call.1} parent=1 // pred_check
      _
    $region47: #{tpu_custom_call.1} parent=1 // pred_check_branch
      %596 = sbr.rel (0) target = $region49
    $region48: #{tpu_custom_call.1} parent=1 // pred_region
      %s598 = ssub.s32 64, 64
      %599 = vsyncadd [#allocation4], %s598
      %s601 = sshll.u32 [#allocation10], 4
      %s602 = int_to_ptr.vmem [resolvable:$true] %s601
      %604 = dma.vmem_to_hbm [thread:$0]  %s602, 64, %s7, [#allocation4]
    $region49: #{tpu_custom_call.1} parent=1 // pred_fallthru
      _
    // Predicated region
    $region50: #{tpu_custom_call.1} parent=1 // pred_check
      _
    $region51: #{tpu_custom_call.1} parent=1 // pred_check_branch
      %606 = sbr.rel (0) target = $region53
    $region52: #{tpu_custom_call.1} parent=1 // pred_region
      %607 = dma.done [#allocation4], 64
    $region53: #{tpu_custom_call.1} parent=1 // pred_fallthru
      _
    %608 = vsyncpa [#allocation3], 1
    %609 = vsyncpa [#allocation6], 1
    %610 = vsyncpa [#allocation9], 1
    %611 = vsyncpa [#allocation4], 1

</llo_original>
